<compile_context>
chip_gen: v7x
topology: tpu7x:2x2x1
jax: 0.10.0
libtpu: 0.0.40
codegen_flags: <defaults>
</compile_context>

<pallas_src>
import functools

import jax
import jax.numpy as jnp
from jax import lax
from jax.experimental import pallas as pl
from jax.experimental.pallas import tpu as pltpu

LANE = 128        # lane-dense channel padding target
SUB_BF16 = 16     # bf16 sublane packing (edge-dim padding target granularity)


def _pad_last(a, target):
    return jnp.pad(a, [(0, 0)] * (a.ndim - 1) + [(0, target - a.shape[-1])])


def _pad_axis(a, axis, target):
    pads = [(0, 0)] * a.ndim
    pads[axis] = (0, target - a.shape[axis])
    return jnp.pad(a, pads)


def _gine_fused_kernel(x_ref, a_ref, s_ref, p_ref,
                       w_e_ref, b_e_ref, w_nn_ref, b_nn_ref,
                       gamma_ref, beta_ref, out_ref,
                       *, eps, bn_eps, num_layers):
    h = x_ref[...]            # [N, Cpad]   f32 node features (lane-padded)
    a = a_ref[...]            # [E, N+Dp]   bf16 = [G | edge_attr]  (merged gather/proj LHS)
    s = s_ref[...]            # [N, E]      bf16 one-hot scatter (dst)
    one_plus_eps = jnp.float32(1.0 + eps)

    for l in range(num_layers):                       # static unroll
        # --- merged gather + edge projection: one MXU call ---------------
        #   [G | ea] @ [h ; W_e] = G@h + ea@W_e  =  x_j + Linear_edge(ea)
        rhs = jnp.concatenate([h.astype(jnp.bfloat16), w_e_ref[l]], axis=0)
        msg = jnp.dot(a, rhs, preferred_element_type=jnp.float32) + b_e_ref[l]
        msg = jnp.maximum(msg, 0.0)                   # [E, Cpad]  ReLU message

        # --- aggregate: sum over incoming edges (one-hot scatter matmul) -
        agg = jnp.dot(s, msg.astype(jnp.bfloat16),
                      preferred_element_type=jnp.float32)          # [N, Cpad]

        # --- update: Linear((1+eps)*x + agg) ------------------------------
        z = one_plus_eps * h + agg
        z = jnp.dot(z.astype(jnp.bfloat16), w_nn_ref[l],
                    preferred_element_type=jnp.float32) + b_nn_ref[l]

        # --- BatchNorm1d (training-mode batch stats, one-pass) ------------
        # N node rows are never padded, so stats use the true batch size.
        m1 = jnp.mean(z, axis=0, keepdims=True)
        m2 = jnp.mean(z * z, axis=0, keepdims=True)
        var = jnp.maximum(m2 - m1 * m1, 0.0)
        z = (z - m1) * lax.rsqrt(var + bn_eps) * gamma_ref[l] + beta_ref[l]

        # --- act (relu, act_first=False); dropout(p=0.0) is identity ------
        h = jnp.maximum(z, 0.0)

    # readout='add': global_add_pool via one-hot matmul
    out_ref[...] = jnp.dot(p_ref[...], h.astype(jnp.bfloat16),
                           preferred_element_type=jnp.float32)     # [B, Cpad]


def gine_forward(x, edge_attr, src, dst, batch, params, num_graphs,
                 *, eps=0.0, bn_eps=1e-5):
    """Fused GINE forward: all layers + add-pool in one pallas_call."""
    N, _ = x.shape
    E, edge_dim = edge_attr.shape
    L = len(params)
    out_ch = params[-1][2].shape[1]
    cpad = LANE
    dpad = ((edge_dim + SUB_BF16 - 1) // SUB_BF16) * SUB_BF16

    # Dense one-hot gather / scatter / pool operators (exact as 0/1 in bf16).
    # TODO(synk): for real graph sizes replace dense one-hot G/S/P with
    # scalar-prefetch index-driven gather/scatter (O(E*C) instead of O(E*N*C)).
    G = jax.nn.one_hot(src, N, dtype=jnp.float32)                    # [E, N]
    S = jax.nn.one_hot(dst, N, dtype=jnp.float32).T                  # [N, E]
    P = jax.nn.one_hot(batch, num_graphs, dtype=jnp.float32).T       # [B, N]

    # Merged gather + edge-projection LHS, built once: [G | edge_attr_pad].
    A = jnp.concatenate([G, _pad_last(edge_attr, dpad)],
                        axis=1).astype(jnp.bfloat16)                 # [E, N+Dp]
    S = S.astype(jnp.bfloat16)
    P = P.astype(jnp.bfloat16)

    x_p = _pad_last(x, cpad).astype(jnp.float32)                     # [N, Cpad]

    # Per-layer parameters zero-padded to a common lane-dense shape, stacked
    # along a leading layer axis so the kernel indexes them statically.
    W_E, B_E, W_NN, B_NN, GAMMA, BETA = [], [], [], [], [], []
    for (w_e, b_e, w_nn, b_nn, gamma, beta) in params:
        W_E.append(_pad_last(_pad_axis(w_e, 0, dpad), cpad))         # [Dp, Cpad]
        B_E.append(_pad_last(b_e, cpad))                             # [1, Cpad]
        W_NN.append(_pad_last(_pad_axis(w_nn, 0, cpad), cpad))       # [Cpad, Cpad]
        B_NN.append(_pad_last(b_nn, cpad))
        GAMMA.append(_pad_last(gamma, cpad))                         # pad gamma with 0
        BETA.append(_pad_last(beta, cpad))
    W_E = jnp.stack(W_E).astype(jnp.bfloat16)
    B_E = jnp.stack(B_E).astype(jnp.float32)
    W_NN = jnp.stack(W_NN).astype(jnp.bfloat16)
    B_NN = jnp.stack(B_NN).astype(jnp.float32)
    GAMMA = jnp.stack(GAMMA).astype(jnp.float32)
    BETA = jnp.stack(BETA).astype(jnp.float32)

    kernel = functools.partial(_gine_fused_kernel, eps=eps, bn_eps=bn_eps,
                               num_layers=L)
    args = (x_p, A, S, P, W_E, B_E, W_NN, B_NN, GAMMA, BETA)

    flops = L * (2 * E * (N + dpad) * cpad      # merged gather + edge proj
                 + 2 * N * E * cpad             # scatter-sum
                 + 2 * N * cpad * cpad)         # transform MLP
    flops += 2 * num_graphs * N * cpad          # add-pool
    bytes_accessed = sum(int(a.size) * a.dtype.itemsize for a in args)
    bytes_accessed += num_graphs * cpad * 4

    vmem = pl.BlockSpec(memory_space=pltpu.MemorySpace.VMEM)
    pooled = pl.pallas_call(
        kernel,
        out_shape=jax.ShapeDtypeStruct((num_graphs, cpad), jnp.float32),
        in_specs=[vmem] * len(args),
        out_specs=vmem,
        cost_estimate=pl.CostEstimate(flops=flops,
                                      transcendentals=L * cpad,
                                      bytes_accessed=bytes_accessed),
    )(*args)
    return pooled[:, :out_ch]


def _reference_forward(x, edge_attr, src, dst, batch, params, B,
                       *, eps=0.0, bn_eps=1e-5):
    """Pure-JAX f32 reference (same semantics) for correctness checking."""
    h = x
    for (w_e, b_e, w_nn, b_nn, gamma, beta) in params:
        ea_p = edge_attr @ w_e + b_e
        msg = jnp.maximum(h[src] + ea_p, 0.0)
        agg = jnp.zeros((h.shape[0], h.shape[1]), jnp.float32).at[dst].add(msg)
        z = ((1.0 + eps) * h + agg) @ w_nn + b_nn
        mean = jnp.mean(z, axis=0, keepdims=True)
        var = jnp.mean((z - mean) ** 2, axis=0, keepdims=True)
        z = (z - mean) / jnp.sqrt(var + bn_eps) * gamma + beta
        h = jnp.maximum(z, 0.0)
    pooled = jnp.zeros((B, h.shape[1]), jnp.float32).at[batch].add(h)
    return pooled


if __name__ == "__main__":
    key = jax.random.PRNGKey(0)
    N, E, B = 32, 64, 2                      # nodes, edges, graphs
    in_ch, hidden_ch, out_ch = 8, 32, 32     # channel_list = [8, 32, 32]
    edge_dim = 8
    eps_gin, bn_eps = 0.0, 1e-5
    channel_list = [in_ch, hidden_ch, out_ch]

    ks = jax.random.split(key, 12)
    x = jax.random.normal(ks[0], (N, in_ch), jnp.float32)
    edge_attr = jax.random.normal(ks[1], (E, edge_dim), jnp.float32)
    src = jax.random.randint(ks[2], (E,), 0, N)
    dst = jax.random.randint(ks[3], (E,), 0, N)
    edge_index = jnp.stack([src, dst])                             # [2, E]
    batch = jnp.concatenate([jnp.zeros(N // 2, jnp.int32),
                             jnp.ones(N - N // 2, jnp.int32)])     # [N]

    # Deterministic synthetic parameters (PyTorch Linear stores [out,in];
    # we build [in,out] directly).
    params = []
    ki = 4
    for cin, cout in zip(channel_list[:-1], channel_list[1:]):
        w_e = jax.random.normal(ks[ki], (edge_dim, cin), jnp.float32) / jnp.sqrt(edge_dim)
        b_e = 0.1 * jax.random.normal(ks[ki + 1], (1, cin), jnp.float32)
        w_nn = jax.random.normal(ks[ki + 2], (cin, cout), jnp.float32) / jnp.sqrt(cin)
        b_nn = 0.1 * jax.random.normal(ks[ki + 3], (1, cout), jnp.float32)
        ki += 4
        gamma = jnp.ones((1, cout), jnp.float32)   # BatchNorm.reset_parameters
        beta = jnp.zeros((1, cout), jnp.float32)
        params.append((w_e, b_e, w_nn, b_nn, gamma, beta))

    # ---- fused Pallas forward (layers + add-pool in one kernel) ----
    out = gine_forward(x, edge_attr, src, dst, batch, params, B,
                       eps=eps_gin, bn_eps=bn_eps)
    out = jax.block_until_ready(out)

    # ---- correctness check vs pure-JAX f32 reference ----
    # (bf16 MXU operands with f32 accumulation => loosen tolerance slightly)
    ref = _reference_forward(x, edge_attr, src, dst, batch, params, B,
                             eps=eps_gin, bn_eps=bn_eps)
    assert out.shape == (B, out_ch)
    assert jnp.allclose(out, ref, atol=5e-2, rtol=5e-2), "mismatch vs reference"

    # TODO(synk): readout='gru' (packed GRU over per-graph sequences), optional
    # node/edge encoders and prediction heads are not configured by default and
    # are not implemented here.
    print("KERNEL_OK")
</pallas_src>

<mosaic_0001>
module attributes {stable_mosaic.version = 11 : i64} {
  func.func @_gine_fused_kernel(%arg0: memref<32x128xf32, #tpu.memory_space<vmem>>, %arg1: memref<64x48xbf16, #tpu.memory_space<vmem>>, %arg2: memref<32x64xbf16, #tpu.memory_space<vmem>>, %arg3: memref<2x32xbf16, #tpu.memory_space<vmem>>, %arg4: memref<2x16x128xbf16, #tpu.memory_space<vmem>>, %arg5: memref<2x1x128xf32, #tpu.memory_space<vmem>>, %arg6: memref<2x128x128xbf16, #tpu.memory_space<vmem>>, %arg7: memref<2x1x128xf32, #tpu.memory_space<vmem>>, %arg8: memref<2x1x128xf32, #tpu.memory_space<vmem>>, %arg9: memref<2x1x128xf32, #tpu.memory_space<vmem>>, %arg10: memref<2x128xf32, #tpu.memory_space<vmem>>) attributes {dimension_semantics = [], scalar_prefetch = 0 : i64, scratch_operands = 0 : i64, tpu.core_type = #tpu.core_type<tc>} {
    %c0 = arith.constant 0 : index
    %c0_0 = arith.constant 0 : index
    %0 = vector.load %arg0[%c0, %c0_0] : memref<32x128xf32, #tpu.memory_space<vmem>>, vector<32x128xf32>
    %c0_1 = arith.constant 0 : index
    %c0_2 = arith.constant 0 : index
    %1 = vector.load %arg1[%c0_1, %c0_2] : memref<64x48xbf16, #tpu.memory_space<vmem>>, vector<64x48xbf16>
    %c0_3 = arith.constant 0 : index
    %c0_4 = arith.constant 0 : index
    %2 = vector.load %arg2[%c0_3, %c0_4] : memref<32x64xbf16, #tpu.memory_space<vmem>>, vector<32x64xbf16>
    %3 = arith.truncf %0 : vector<32x128xf32> to vector<32x128xbf16>
    %c0_5 = arith.constant 0 : index
    %c0_6 = arith.constant 0 : index
    %c0_7 = arith.constant 0 : index
    %4 = vector.load %arg4[%c0_5, %c0_6, %c0_7] : memref<2x16x128xbf16, #tpu.memory_space<vmem>>, vector<1x16x128xbf16>
    %5 = vector.shape_cast %4 : vector<1x16x128xbf16> to vector<16x128xbf16>
    %6 = tpu.concatenate %3, %5 in 0 : vector<32x128xbf16>, vector<16x128xbf16> -> vector<48x128xbf16>
    %cst = arith.constant dense<0.000000e+00> : vector<64x128xf32>
    %7 = tpu.matmul %1, %6, %cst {dimension_numbers = #tpu.dot_dimension_numbers<[1], [0], [0], [1], [0, 0, 1, 1], [], []>} : vector<64x48xbf16>, vector<48x128xbf16>, vector<64x128xf32> -> vector<64x128xf32>
    %c0_8 = arith.constant 0 : index
    %c0_9 = arith.constant 0 : index
    %c0_10 = arith.constant 0 : index
    %8 = vector.load %arg5[%c0_8, %c0_9, %c0_10] : memref<2x1x128xf32, #tpu.memory_space<vmem>>, vector<1x1x128xf32>
    %9 = vector.shape_cast %8 : vector<1x1x128xf32> to vector<1x128xf32>
    %10 = vector.broadcast %9 : vector<1x128xf32> to vector<64x128xf32>
    %11 = arith.addf %7, %10 : vector<64x128xf32>
    %cst_11 = arith.constant 0.000000e+00 : f32
    %12 = vector.broadcast %cst_11 : f32 to vector<64x128xf32>
    %13 = arith.maximumf %11, %12 : vector<64x128xf32>
    %14 = arith.truncf %13 : vector<64x128xf32> to vector<64x128xbf16>
    %cst_12 = arith.constant dense<0.000000e+00> : vector<32x128xf32>
    %15 = tpu.matmul %2, %14, %cst_12 {dimension_numbers = #tpu.dot_dimension_numbers<[1], [0], [0], [1], [0, 0, 1, 1], [], []>} : vector<32x64xbf16>, vector<64x128xbf16>, vector<32x128xf32> -> vector<32x128xf32>
    %cst_13 = arith.constant 1.000000e+00 : f32
    %16 = vector.broadcast %cst_13 : f32 to vector<32x128xf32>
    %17 = arith.mulf %16, %0 : vector<32x128xf32>
    %18 = arith.addf %17, %15 : vector<32x128xf32>
    %19 = arith.truncf %18 : vector<32x128xf32> to vector<32x128xbf16>
    %c0_14 = arith.constant 0 : index
    %c0_15 = arith.constant 0 : index
    %c0_16 = arith.constant 0 : index
    %20 = vector.load %arg6[%c0_14, %c0_15, %c0_16] : memref<2x128x128xbf16, #tpu.memory_space<vmem>>, vector<1x128x128xbf16>
    %21 = vector.shape_cast %20 : vector<1x128x128xbf16> to vector<128x128xbf16>
    %cst_17 = arith.constant dense<0.000000e+00> : vector<32x128xf32>
    %22 = tpu.matmul %19, %21, %cst_17 {dimension_numbers = #tpu.dot_dimension_numbers<[1], [0], [0], [1], [0, 0, 1, 1], [], []>} : vector<32x128xbf16>, vector<128x128xbf16>, vector<32x128xf32> -> vector<32x128xf32>
    %c0_18 = arith.constant 0 : index
    %c0_19 = arith.constant 0 : index
    %c0_20 = arith.constant 0 : index
    %23 = vector.load %arg7[%c0_18, %c0_19, %c0_20] : memref<2x1x128xf32, #tpu.memory_space<vmem>>, vector<1x1x128xf32>
    %24 = vector.shape_cast %23 : vector<1x1x128xf32> to vector<1x128xf32>
    %25 = vector.broadcast %24 : vector<1x128xf32> to vector<32x128xf32>
    %26 = arith.addf %22, %25 : vector<32x128xf32>
    %cst_21 = arith.constant dense<0.000000e+00> : vector<128xf32>
    %27 = vector.multi_reduction <add>, %26, %cst_21 [0] : vector<32x128xf32> to vector<128xf32>
    %28 = vector.shape_cast %27 : vector<128xf32> to vector<1x128xf32>
    %cst_22 = arith.constant 3.200000e+01 : f32
    %29 = vector.broadcast %cst_22 : f32 to vector<1x128xf32>
    %30 = arith.divf %28, %29 : vector<1x128xf32>
    %31 = arith.mulf %26, %26 : vector<32x128xf32>
    %cst_23 = arith.constant dense<0.000000e+00> : vector<128xf32>
    %32 = vector.multi_reduction <add>, %31, %cst_23 [0] : vector<32x128xf32> to vector<128xf32>
    %33 = vector.shape_cast %32 : vector<128xf32> to vector<1x128xf32>
    %cst_24 = arith.constant 3.200000e+01 : f32
    %34 = vector.broadcast %cst_24 : f32 to vector<1x128xf32>
    %35 = arith.divf %33, %34 : vector<1x128xf32>
    %36 = arith.mulf %30, %30 : vector<1x128xf32>
    %37 = arith.subf %35, %36 : vector<1x128xf32>
    %cst_25 = arith.constant 0.000000e+00 : f32
    %38 = vector.broadcast %cst_25 : f32 to vector<1x128xf32>
    %39 = arith.maximumf %37, %38 : vector<1x128xf32>
    %40 = vector.broadcast %30 : vector<1x128xf32> to vector<32x128xf32>
    %41 = arith.subf %26, %40 : vector<32x128xf32>
    %cst_26 = arith.constant 9.99999974E-6 : f32
    %42 = vector.broadcast %cst_26 : f32 to vector<1x128xf32>
    %43 = arith.addf %39, %42 : vector<1x128xf32>
    %44 = math.rsqrt %43 : vector<1x128xf32>
    %45 = vector.broadcast %44 : vector<1x128xf32> to vector<32x128xf32>
    %46 = arith.mulf %41, %45 : vector<32x128xf32>
    %c0_27 = arith.constant 0 : index
    %c0_28 = arith.constant 0 : index
    %c0_29 = arith.constant 0 : index
    %47 = vector.load %arg8[%c0_27, %c0_28, %c0_29] : memref<2x1x128xf32, #tpu.memory_space<vmem>>, vector<1x1x128xf32>
    %48 = vector.shape_cast %47 : vector<1x1x128xf32> to vector<1x128xf32>
    %49 = vector.broadcast %48 : vector<1x128xf32> to vector<32x128xf32>
    %50 = arith.mulf %46, %49 : vector<32x128xf32>
    %c0_30 = arith.constant 0 : index
    %c0_31 = arith.constant 0 : index
    %c0_32 = arith.constant 0 : index
    %51 = vector.load %arg9[%c0_30, %c0_31, %c0_32] : memref<2x1x128xf32, #tpu.memory_space<vmem>>, vector<1x1x128xf32>
    %52 = vector.shape_cast %51 : vector<1x1x128xf32> to vector<1x128xf32>
    %53 = vector.broadcast %52 : vector<1x128xf32> to vector<32x128xf32>
    %54 = arith.addf %50, %53 : vector<32x128xf32>
    %cst_33 = arith.constant 0.000000e+00 : f32
    %55 = vector.broadcast %cst_33 : f32 to vector<32x128xf32>
    %56 = arith.maximumf %54, %55 : vector<32x128xf32>
    %57 = arith.truncf %56 : vector<32x128xf32> to vector<32x128xbf16>
    %c1 = arith.constant 1 : index
    %c0_34 = arith.constant 0 : index
    %c0_35 = arith.constant 0 : index
    %58 = vector.load %arg4[%c1, %c0_34, %c0_35] : memref<2x16x128xbf16, #tpu.memory_space<vmem>>, vector<1x16x128xbf16>
    %59 = vector.shape_cast %58 : vector<1x16x128xbf16> to vector<16x128xbf16>
    %60 = tpu.concatenate %57, %59 in 0 : vector<32x128xbf16>, vector<16x128xbf16> -> vector<48x128xbf16>
    %cst_36 = arith.constant dense<0.000000e+00> : vector<64x128xf32>
    %61 = tpu.matmul %1, %60, %cst_36 {dimension_numbers = #tpu.dot_dimension_numbers<[1], [0], [0], [1], [0, 0, 1, 1], [], []>} : vector<64x48xbf16>, vector<48x128xbf16>, vector<64x128xf32> -> vector<64x128xf32>
    %c1_37 = arith.constant 1 : index
    %c0_38 = arith.constant 0 : index
    %c0_39 = arith.constant 0 : index
    %62 = vector.load %arg5[%c1_37, %c0_38, %c0_39] : memref<2x1x128xf32, #tpu.memory_space<vmem>>, vector<1x1x128xf32>
    %63 = vector.shape_cast %62 : vector<1x1x128xf32> to vector<1x128xf32>
    %64 = vector.broadcast %63 : vector<1x128xf32> to vector<64x128xf32>
    %65 = arith.addf %61, %64 : vector<64x128xf32>
    %cst_40 = arith.constant 0.000000e+00 : f32
    %66 = vector.broadcast %cst_40 : f32 to vector<64x128xf32>
    %67 = arith.maximumf %65, %66 : vector<64x128xf32>
    %68 = arith.truncf %67 : vector<64x128xf32> to vector<64x128xbf16>
    %cst_41 = arith.constant dense<0.000000e+00> : vector<32x128xf32>
    %69 = tpu.matmul %2, %68, %cst_41 {dimension_numbers = #tpu.dot_dimension_numbers<[1], [0], [0], [1], [0, 0, 1, 1], [], []>} : vector<32x64xbf16>, vector<64x128xbf16>, vector<32x128xf32> -> vector<32x128xf32>
    %cst_42 = arith.constant 1.000000e+00 : f32
    %70 = vector.broadcast %cst_42 : f32 to vector<32x128xf32>
    %71 = arith.mulf %70, %56 : vector<32x128xf32>
    %72 = arith.addf %71, %69 : vector<32x128xf32>
    %73 = arith.truncf %72 : vector<32x128xf32> to vector<32x128xbf16>
    %c1_43 = arith.constant 1 : index
    %c0_44 = arith.constant 0 : index
    %c0_45 = arith.constant 0 : index
    %74 = vector.load %arg6[%c1_43, %c0_44, %c0_45] : memref<2x128x128xbf16, #tpu.memory_space<vmem>>, vector<1x128x128xbf16>
    %75 = vector.shape_cast %74 : vector<1x128x128xbf16> to vector<128x128xbf16>
    %cst_46 = arith.constant dense<0.000000e+00> : vector<32x128xf32>
    %76 = tpu.matmul %73, %75, %cst_46 {dimension_numbers = #tpu.dot_dimension_numbers<[1], [0], [0], [1], [0, 0, 1, 1], [], []>} : vector<32x128xbf16>, vector<128x128xbf16>, vector<32x128xf32> -> vector<32x128xf32>
    %c1_47 = arith.constant 1 : index
    %c0_48 = arith.constant 0 : index
    %c0_49 = arith.constant 0 : index
    %77 = vector.load %arg7[%c1_47, %c0_48, %c0_49] : memref<2x1x128xf32, #tpu.memory_space<vmem>>, vector<1x1x128xf32>
    %78 = vector.shape_cast %77 : vector<1x1x128xf32> to vector<1x128xf32>
    %79 = vector.broadcast %78 : vector<1x128xf32> to vector<32x128xf32>
    %80 = arith.addf %76, %79 : vector<32x128xf32>
    %cst_50 = arith.constant dense<0.000000e+00> : vector<128xf32>
    %81 = vector.multi_reduction <add>, %80, %cst_50 [0] : vector<32x128xf32> to vector<128xf32>
    %82 = vector.shape_cast %81 : vector<128xf32> to vector<1x128xf32>
    %cst_51 = arith.constant 3.200000e+01 : f32
    %83 = vector.broadcast %cst_51 : f32 to vector<1x128xf32>
    %84 = arith.divf %82, %83 : vector<1x128xf32>
    %85 = arith.mulf %80, %80 : vector<32x128xf32>
    %cst_52 = arith.constant dense<0.000000e+00> : vector<128xf32>
    %86 = vector.multi_reduction <add>, %85, %cst_52 [0] : vector<32x128xf32> to vector<128xf32>
    %87 = vector.shape_cast %86 : vector<128xf32> to vector<1x128xf32>
    %cst_53 = arith.constant 3.200000e+01 : f32
    %88 = vector.broadcast %cst_53 : f32 to vector<1x128xf32>
    %89 = arith.divf %87, %88 : vector<1x128xf32>
    %90 = arith.mulf %84, %84 : vector<1x128xf32>
    %91 = arith.subf %89, %90 : vector<1x128xf32>
    %cst_54 = arith.constant 0.000000e+00 : f32
    %92 = vector.broadcast %cst_54 : f32 to vector<1x128xf32>
    %93 = arith.maximumf %91, %92 : vector<1x128xf32>
    %94 = vector.broadcast %84 : vector<1x128xf32> to vector<32x128xf32>
    %95 = arith.subf %80, %94 : vector<32x128xf32>
    %cst_55 = arith.constant 9.99999974E-6 : f32
    %96 = vector.broadcast %cst_55 : f32 to vector<1x128xf32>
    %97 = arith.addf %93, %96 : vector<1x128xf32>
    %98 = math.rsqrt %97 : vector<1x128xf32>
    %99 = vector.broadcast %98 : vector<1x128xf32> to vector<32x128xf32>
    %100 = arith.mulf %95, %99 : vector<32x128xf32>
    %c1_56 = arith.constant 1 : index
    %c0_57 = arith.constant 0 : index
    %c0_58 = arith.constant 0 : index
    %101 = vector.load %arg8[%c1_56, %c0_57, %c0_58] : memref<2x1x128xf32, #tpu.memory_space<vmem>>, vector<1x1x128xf32>
    %102 = vector.shape_cast %101 : vector<1x1x128xf32> to vector<1x128xf32>
    %103 = vector.broadcast %102 : vector<1x128xf32> to vector<32x128xf32>
    %104 = arith.mulf %100, %103 : vector<32x128xf32>
    %c1_59 = arith.constant 1 : index
    %c0_60 = arith.constant 0 : index
    %c0_61 = arith.constant 0 : index
    %105 = vector.load %arg9[%c1_59, %c0_60, %c0_61] : memref<2x1x128xf32, #tpu.memory_space<vmem>>, vector<1x1x128xf32>
    %106 = vector.shape_cast %105 : vector<1x1x128xf32> to vector<1x128xf32>
    %107 = vector.broadcast %106 : vector<1x128xf32> to vector<32x128xf32>
    %108 = arith.addf %104, %107 : vector<32x128xf32>
    %cst_62 = arith.constant 0.000000e+00 : f32
    %109 = vector.broadcast %cst_62 : f32 to vector<32x128xf32>
    %110 = arith.maximumf %108, %109 : vector<32x128xf32>
    %c0_63 = arith.constant 0 : index
    %c0_64 = arith.constant 0 : index
    %111 = vector.load %arg3[%c0_63, %c0_64] : memref<2x32xbf16, #tpu.memory_space<vmem>>, vector<2x32xbf16>
    %112 = arith.truncf %110 : vector<32x128xf32> to vector<32x128xbf16>
    %cst_65 = arith.constant dense<0.000000e+00> : vector<2x128xf32>
    %113 = tpu.matmul %111, %112, %cst_65 {dimension_numbers = #tpu.dot_dimension_numbers<[1], [0], [0], [1], [0, 0, 1, 1], [], []>} : vector<2x32xbf16>, vector<32x128xbf16>, vector<2x128xf32> -> vector<2x128xf32>
    %c0_66 = arith.constant 0 : index
    %c0_67 = arith.constant 0 : index
    %114 = vector.load %arg10[%c0_66, %c0_67] : memref<2x128xf32, #tpu.memory_space<vmem>>, vector<2x128xf32>
    tpu.vector_store %arg10[%c0_66, %c0_67], %113 {strides = array<i32>} : memref<2x128xf32, #tpu.memory_space<vmem>>, vector<2x128xf32>,
    return
  }
}

</mosaic_0001>

<llo_original>
// kernel: tpu_custom_call.1
$region0: #{tpu_custom_call.1}
  #allocation0 [shape = 'u32[]', space=smem, size = 0x4, offset = 0x4, fixed_abs, tag = 'smem constant byte address 0x4 - core index']
  #allocation1 [shape = 'u32[144,128]{1,0:T(1,128)}', space=vmem, size = 0x12000, scoped, tag = 'internal scratch']
  %s0 = inlined_call_operand.vmem [shape: f32[32,128], index: 0, kind: input, shape index: {}]
  %s1 = inlined_call_operand.vmem [shape: bf16[64,48], index: 1, kind: input, shape index: {}]
  %s2 = inlined_call_operand.vmem [shape: bf16[32,64], index: 2, kind: input, shape index: {}]
  %s3 = inlined_call_operand.vmem [shape: bf16[2,32], index: 3, kind: input, shape index: {}]
  %s4 = inlined_call_operand.vmem [shape: bf16[2,16,128], index: 4, kind: input, shape index: {}]
  %s5 = inlined_call_operand.vmem [shape: f32[2,1,128], index: 5, kind: input, shape index: {}]
  %s6 = inlined_call_operand.hbm [shape: bf16[2,128,128], index: 6, kind: input, shape index: {}]
  %s7 = inlined_call_operand.vmem [shape: f32[2,1,128], index: 7, kind: input, shape index: {}]
  %s8 = inlined_call_operand.vmem [shape: f32[2,1,128], index: 8, kind: input, shape index: {}]
  %s9 = inlined_call_operand.vmem [shape: f32[2,1,128], index: 9, kind: input, shape index: {}]
  %s10 = inlined_call_operand.hbm [shape: f32[2,128], index: 10, kind: output, shape index: {}]
  %s11 = sld [smem:[#allocation0]]
  $region54: #{tpu_custom_call.1} parent=0
    _
  %s13 = ssub.s32 1, %s11
  %s14 = scalar_select 0, %s13, %s11
  $region1: #{tpu_custom_call.1} parent=0
    #allocation2 [shape = 'u8[65536]{0}', space=vmem, size = 0x10000, scoped, tag = 'input window, operand 6, single buffered']
    #allocation3 [shape = 's32[1]{0}', space=sflag, size = 0x4, scoped, tag = 'scoped memory for tpu_custom_call.1']
    #allocation4 [shape = 's32[1]{0}', space=sflag, size = 0x4, scoped, tag = 'scoped memory for tpu_custom_call.1']
    #allocation5 [shape = 'u8[1024]{0}', space=vmem, size = 0x400, scoped, tag = 'output window, operand 0, single buffered']
    %15 = vsyncpa [#allocation3], 0
    %16 = vsyncpa [#allocation4], 0
    // Predicated region
    $region2: #{tpu_custom_call.1} parent=1 // pred_check
      _
    $region3: #{tpu_custom_call.1} parent=1 // pred_check_branch
      %18 = sbr.rel (0) target = $region5
    $region4: #{tpu_custom_call.1} parent=1 // pred_region
      _
    $region5: #{tpu_custom_call.1} parent=1 // pred_fallthru
      _
    // Predicated region
    $region6: #{tpu_custom_call.1} parent=1 // pred_check
      _
    $region7: #{tpu_custom_call.1} parent=1 // pred_check_branch
      %20 = sbr.rel (0) target = $region9
    $region8: #{tpu_custom_call.1} parent=1 // pred_region
      _
    $region9: #{tpu_custom_call.1} parent=1 // pred_fallthru
      _
    // Predicated region
    $region10: #{tpu_custom_call.1} parent=1 // pred_check
      _
    $region11: #{tpu_custom_call.1} parent=1 // pred_check_branch
      %22 = sbr.rel (0) target = $region13
    $region12: #{tpu_custom_call.1} parent=1 // pred_region
      _
    $region13: #{tpu_custom_call.1} parent=1 // pred_fallthru
      _
    // Predicated region
    $region14: #{tpu_custom_call.1} parent=1 // pred_check
      _
    $region15: #{tpu_custom_call.1} parent=1 // pred_check_branch
      %24 = sbr.rel (0) target = $region17
    $region16: #{tpu_custom_call.1} parent=1 // pred_region
      _
    $region17: #{tpu_custom_call.1} parent=1 // pred_fallthru
      _
    // Predicated region
    $region18: #{tpu_custom_call.1} parent=1 // pred_check
      _
    $region19: #{tpu_custom_call.1} parent=1 // pred_check_branch
      %26 = sbr.rel (0) target = $region21
    $region20: #{tpu_custom_call.1} parent=1 // pred_region
      _
    $region21: #{tpu_custom_call.1} parent=1 // pred_fallthru
      _
    // Predicated region
    $region22: #{tpu_custom_call.1} parent=1 // pred_check
      _
    $region23: #{tpu_custom_call.1} parent=1 // pred_check_branch
      %28 = sbr.rel (0) target = $region25
    $region24: #{tpu_custom_call.1} parent=1 // pred_region
      _
    $region25: #{tpu_custom_call.1} parent=1 // pred_fallthru
      _
    // Predicated region
    $region26: #{tpu_custom_call.1} parent=1 // pred_check
      _
    $region27: #{tpu_custom_call.1} parent=1 // pred_check_branch
      %30 = sbr.rel (0) target = $region29
    $region28: #{tpu_custom_call.1} parent=1 // pred_region
      %s32 = ssub.s32 2048, 2048
      %33 = vsyncadd [#allocation3], %s32
      %s34 = sshll.u32 [#allocation2], 4
      %s35 = int_to_ptr.vmem [resolvable:$true] %s34
      %40 = dma.hbm_to_vmem [thread:$0]  %s6, 2048, %s35, [#allocation3], 64, 64, 4
    $region29: #{tpu_custom_call.1} parent=1 // pred_fallthru
      _
    // Predicated region
    $region30: #{tpu_custom_call.1} parent=1 // pred_check
      _
    $region31: #{tpu_custom_call.1} parent=1 // pred_check_branch
      %42 = sbr.rel (0) target = $region33
    $region32: #{tpu_custom_call.1} parent=1 // pred_region
      _
    $region33: #{tpu_custom_call.1} parent=1 // pred_fallthru
      _
    // Predicated region
    $region34: #{tpu_custom_call.1} parent=1 // pred_check
      _
    $region35: #{tpu_custom_call.1} parent=1 // pred_check_branch
      %44 = sbr.rel (0) target = $region37
    $region36: #{tpu_custom_call.1} parent=1 // pred_region
      _
    $region37: #{tpu_custom_call.1} parent=1 // pred_fallthru
      _
    // Predicated region
    $region38: #{tpu_custom_call.1} parent=1 // pred_check
      _
    $region39: #{tpu_custom_call.1} parent=1 // pred_check_branch
      %46 = sbr.rel (0) target = $region41
    $region40: #{tpu_custom_call.1} parent=1 // pred_region
      _
    $region41: #{tpu_custom_call.1} parent=1 // pred_fallthru
      _
    // Predicated region
    $region42: #{tpu_custom_call.1} parent=1 // pred_check
      _
    $region43: #{tpu_custom_call.1} parent=1 // pred_check_branch
      %48 = sbr.rel (0) target = $region45
    $region44: #{tpu_custom_call.1} parent=1 // pred_region
      %49 = dma.done [#allocation3], 2048
    $region45: #{tpu_custom_call.1} parent=1 // pred_fallthru
      _
    %v51 = vld [vmem:[%s0] sm:$0xff]
    %v52 = vld [vmem:[%s0 + $0x8] sm:$0xff]
    %v53 = vld [vmem:[%s0 + $0x10] sm:$0xff]
    %v54 = vld [vmem:[%s0 + $0x18] sm:$0xff]
    %v55 = vld [vmem:[%s1] sm:$0xf]
    %v56 = vld [vmem:[%s1 + $0x4] sm:$0xf]
    %v57 = vld [vmem:[%s1 + $0x8] sm:$0xf]
    %v58 = vld [vmem:[%s1 + $0xc] sm:$0xf]
    %v59 = vld [vmem:[%s1 + $0x10] sm:$0xf]
    %v60 = vld [vmem:[%s1 + $0x14] sm:$0xf]
    %v61 = vld [vmem:[%s1 + $0x18] sm:$0xf]
    %v62 = vld [vmem:[%s1 + $0x1c] sm:$0xf]
    %v63 = vld [vmem:[%s2] sm:$0xf]
    %v64 = vld [vmem:[%s2 + $0x4] sm:$0xf]
    %v65 = vld [vmem:[%s2 + $0x8] sm:$0xf]
    %v66 = vld [vmem:[%s2 + $0xc] sm:$0xf]
    %v67 = vpack.c.bf16 %v52, %v51
    %v68 = vpack.c.bf16 %v54, %v53
    %v69 = vld [vmem:[%s4] sm:$0xf]
    %v70 = vld [vmem:[%s4 + $0x4] sm:$0xf]
    %v73 = vunpack.c.l.b16 %v69
    %v74 = vunpack.c.l.b16 %v70
    %v75 = vpack.c.b16 %v74, %v73
    %v77 = vld [vmem:[%s5] sm:$0x1]
    %v79 = vlaneseq
    %v80 = vshrl.u32 %v79, 7
    %v81 = vsub.s32 0, %v80
    %v82 = vrot.slane %v77, %v81
    %v92 = vunpack.c.l.b16 %v55
    %v93 = vunpack.c.l.b16 %v56
    %v94 = vunpack.c.l.b16 %v57
    %v95 = vunpack.c.l.b16 %v58
    %v96 = vunpack.c.l.b16 %v59
    %v97 = vunpack.c.l.b16 %v60
    %v98 = vunpack.c.l.b16 %v61
    %v99 = vunpack.c.l.b16 %v62
    %v100 = vpack.c.b16 %v93, %v92
    %v101 = vpack.c.b16 %v95, %v94
    %v102 = vpack.c.b16 %v97, %v96
    %v103 = vpack.c.b16 %v99, %v98
    %vm104 = vcmask 392192
    %v106 = vsel %vm104, %v100, 0
    %v109 = vsel %vm104, %v101, 0
    %v112 = vsel %vm104, %v102, 0
    %v115 = vsel %vm104, %v103, 0
    %117 = vmatprep.subr.bf16.mxu0 0
    %118 = vmatpush1.bf16.msra.mxu0 %v67
    %119 = vmatprep.subr.bf16.mxu0 0
    %120 = vmatpush1.bf16.msra.mxu0 %v68
    %121 = vmatprep.subr.bf16.mxu0 0
    %122 = vmatpush1.bf16.msra.mxu0 %v75
    %123 = vmatprep.subr.bf16.mxu0 0
    %124 = vmatpush1.bf16.msra.mxu0 0
    %125 = vmatprep.subr.bf16.mxu0 0
    %126 = vmatpush1.bf16.msra.mxu0 0
    %127 = vmatprep.subr.bf16.mxu0 0
    %128 = vmatpush1.bf16.msra.mxu0 0
    %129 = vmatprep.subr.bf16.mxu0 0
    %130 = vmatpush1.bf16.msra.mxu0 0
    %131 = vmatprep.subr.bf16.mxu0 0
    %132 = vmatpush1.bf16.msra.mxu0 0
    %133 = vmatprep.subr.bf16.mxu0 0
    %134 = vmatpush1.bf16.msra.mxu0 0
    %135 = vmatprep.subr.bf16.mxu0 0
    %136 = vmatpush1.bf16.msra.mxu0 0
    %137 = vmatprep.subr.bf16.mxu0 0
    %138 = vmatpush1.bf16.msra.mxu0 0
    %139 = vmatprep.subr.bf16.mxu0 0
    %140 = vmatpush1.bf16.msra.mxu0 0
    %141 = vmatprep.subr.bf16.mxu0 0
    %142 = vmatpush1.bf16.msra.mxu0 0
    %143 = vmatprep.subr.bf16.mxu0 0
    %144 = vmatpush1.bf16.msra.mxu0 0
    %145 = vmatprep.subr.bf16.mxu0 0
    %146 = vmatpush1.bf16.msra.mxu0 0
    %147 = vmatprep.subr.bf16.mxu0 0
    %148 = vmatpush1.bf16.msra.mxu0 0
    %149 = vmatprep.mubr.bf16.mxu0 0
    %150 = vmatmul.mubr.bf16.gmra.mrb[0].mxu0 %v106
    %v151 = vpop.f32.mrb[0].mxu0
    %v152 = vadd.f32 %v82, %v151
    %v153 = vpop.f32.mrb[0].mxu0
    %v154 = vpop.f32.mrb[0].mxu0
    %v155 = vadd.f32 %v82, %v154
    %v156 = vpop.f32.mrb[0].mxu0
    %157 = vmatprep.mubr.bf16.mxu0 0
    %158 = vmatmul.mubr.bf16.gmra.mrb[0].mxu0 %v109
    %v159 = vpop.f32.mrb[0].mxu0
    %v160 = vadd.f32 %v82, %v159
    %v161 = vpop.f32.mrb[0].mxu0
    %v162 = vpop.f32.mrb[0].mxu0
    %v163 = vadd.f32 %v82, %v162
    %v164 = vpop.f32.mrb[0].mxu0
    %165 = vmatprep.mubr.bf16.mxu0 0
    %166 = vmatmul.mubr.bf16.gmra.mrb[0].mxu0 %v112
    %v167 = vpop.f32.mrb[0].mxu0
    %v168 = vadd.f32 %v82, %v167
    %v169 = vpop.f32.mrb[0].mxu0
    %v170 = vpop.f32.mrb[0].mxu0
    %v171 = vadd.f32 %v82, %v170
    %v172 = vpop.f32.mrb[0].mxu0
    %173 = vmatprep.mubr.bf16.mxu0 0
    %174 = vmatmul.mubr.bf16.gmra.mrb[0].mxu0 %v115
    %v175 = vpop.f32.mrb[0].mxu0
    %v176 = vadd.f32 %v82, %v175
    %v177 = vpop.f32.mrb[0].mxu0
    %v178 = vpop.f32.mrb[0].mxu0
    %v179 = vadd.f32 %v82, %v178
    %v180 = vpop.f32.mrb[0].mxu0
    %181 = vdwg.mxu0
    %v182 = vmax.f32 %v152, 0.0
    %v183 = vmax.f32 %v155, 0.0
    %v184 = vmax.f32 %v160, 0.0
    %v185 = vmax.f32 %v163, 0.0
    %v186 = vmax.f32 %v168, 0.0
    %v187 = vmax.f32 %v171, 0.0
    %v188 = vmax.f32 %v176, 0.0
    %v189 = vmax.f32 %v179, 0.0
    %v190 = vpack.c.bf16 %v183, %v182
    %v191 = vpack.c.bf16 %v185, %v184
    %v192 = vpack.c.bf16 %v187, %v186
    %v193 = vpack.c.bf16 %v189, %v188
    %v198 = vunpack.c.l.b16 %v63
    %v199 = vunpack.c.l.b16 %v64
    %v200 = vunpack.c.l.b16 %v65
    %v201 = vunpack.c.l.b16 %v66
    %v202 = vpack.c.b16 %v199, %v198
    %v203 = vpack.c.b16 %v201, %v200
    %vm204 = vcmask 523264
    %v206 = vsel %vm204, %v202, 0
    %v209 = vsel %vm204, %v203, 0
    %211 = vmatprep.subr.bf16.mxu0 0
    %212 = vmatpush1.bf16.msra.mxu0 %v190
    %213 = vmatprep.subr.bf16.mxu0 0
    %214 = vmatpush1.bf16.msra.mxu0 %v191
    %215 = vmatprep.subr.bf16.mxu0 0
    %216 = vmatpush1.bf16.msra.mxu0 %v192
    %217 = vmatprep.subr.bf16.mxu0 0
    %218 = vmatpush1.bf16.msra.mxu0 %v193
    %219 = vmatprep.subr.bf16.mxu0 0
    %220 = vmatpush1.bf16.msra.mxu0 0
    %221 = vmatprep.subr.bf16.mxu0 0
    %222 = vmatpush1.bf16.msra.mxu0 0
    %223 = vmatprep.subr.bf16.mxu0 0
    %224 = vmatpush1.bf16.msra.mxu0 0
    %225 = vmatprep.subr.bf16.mxu0 0
    %226 = vmatpush1.bf16.msra.mxu0 0
    %227 = vmatprep.subr.bf16.mxu0 0
    %228 = vmatpush1.bf16.msra.mxu0 0
    %229 = vmatprep.subr.bf16.mxu0 0
    %230 = vmatpush1.bf16.msra.mxu0 0
    %231 = vmatprep.subr.bf16.mxu0 0
    %232 = vmatpush1.bf16.msra.mxu0 0
    %233 = vmatprep.subr.bf16.mxu0 0
    %234 = vmatpush1.bf16.msra.mxu0 0
    %235 = vmatprep.subr.bf16.mxu0 0
    %236 = vmatpush1.bf16.msra.mxu0 0
    %237 = vmatprep.subr.bf16.mxu0 0
    %238 = vmatpush1.bf16.msra.mxu0 0
    %239 = vmatprep.subr.bf16.mxu0 0
    %240 = vmatpush1.bf16.msra.mxu0 0
    %241 = vmatprep.subr.bf16.mxu0 0
    %242 = vmatpush1.bf16.msra.mxu0 0
    %243 = vmatprep.mubr.bf16.mxu0 0
    %244 = vmatmul.mubr.bf16.gmra.mrb[0].mxu0 %v206
    %v245 = vpop.f32.mrb[0].mxu0
    %v246 = vadd.f32 0.0, %v245
    %v247 = vpop.f32.mrb[0].mxu0
    %v248 = vpop.f32.mrb[0].mxu0
    %v249 = vadd.f32 0.0, %v248
    %v250 = vpop.f32.mrb[0].mxu0
    %251 = vmatprep.mubr.bf16.mxu0 0
    %252 = vmatmul.mubr.bf16.gmra.mrb[0].mxu0 %v209
    %v253 = vpop.f32.mrb[0].mxu0
    %v254 = vadd.f32 0.0, %v253
    %v255 = vpop.f32.mrb[0].mxu0
    %v256 = vpop.f32.mrb[0].mxu0
    %v257 = vadd.f32 0.0, %v256
    %v258 = vpop.f32.mrb[0].mxu0
    %259 = vdwg.mxu0
    %v260 = vadd.f32 %v51, %v246
    %v261 = vadd.f32 %v52, %v249
    %v262 = vadd.f32 %v53, %v254
    %v263 = vadd.f32 %v54, %v257
    %v264 = vpack.c.bf16 %v261, %v260
    %v265 = vpack.c.bf16 %v263, %v262
    %v266 = vld [vmem:[#allocation2] sm:$0xf]
    %v267 = vld [vmem:[#allocation2 + $0x4] sm:$0xf]
    %v268 = vld [vmem:[#allocation2 + $0x8] sm:$0xf]
    %v269 = vld [vmem:[#allocation2 + $0xc] sm:$0xf]
    %v270 = vld [vmem:[#allocation2 + $0x10] sm:$0xf]
    %v271 = vld [vmem:[#allocation2 + $0x14] sm:$0xf]
    %v272 = vld [vmem:[#allocation2 + $0x18] sm:$0xf]
    %v273 = vld [vmem:[#allocation2 + $0x1c] sm:$0xf]
    %v274 = vld [vmem:[#allocation2 + $0x20] sm:$0xf]
    %v275 = vld [vmem:[#allocation2 + $0x24] sm:$0xf]
    %v276 = vld [vmem:[#allocation2 + $0x28] sm:$0xf]
    %v277 = vld [vmem:[#allocation2 + $0x2c] sm:$0xf]
    %v278 = vld [vmem:[#allocation2 + $0x30] sm:$0xf]
    %v279 = vld [vmem:[#allocation2 + $0x34] sm:$0xf]
    %v280 = vld [vmem:[#allocation2 + $0x38] sm:$0xf]
    %v281 = vld [vmem:[#allocation2 + $0x3c] sm:$0xf]
    %v282 = vld [vmem:[%s7] sm:$0x1]
    %v284 = vlaneseq
    %v285 = vshrl.u32 %v284, 7
    %v286 = vsub.s32 0, %v285
    %v287 = vrot.slane %v282, %v286
    %v305 = vunpack.c.l.b16 %v266
    %v306 = vunpack.c.l.b16 %v267
    %v307 = vunpack.c.l.b16 %v268
    %v308 = vunpack.c.l.b16 %v269
    %v309 = vunpack.c.l.b16 %v270
    %v310 = vunpack.c.l.b16 %v271
    %v311 = vunpack.c.l.b16 %v272
    %v312 = vunpack.c.l.b16 %v273
    %v313 = vunpack.c.l.b16 %v274
    %v314 = vunpack.c.l.b16 %v275
    %v315 = vunpack.c.l.b16 %v276
    %v316 = vunpack.c.l.b16 %v277
    %v317 = vunpack.c.l.b16 %v278
    %v318 = vunpack.c.l.b16 %v279
    %v319 = vunpack.c.l.b16 %v280
    %v320 = vunpack.c.l.b16 %v281
    %v321 = vpack.c.b16 %v306, %v305
    %v322 = vpack.c.b16 %v308, %v307
    %v323 = vpack.c.b16 %v310, %v309
    %v324 = vpack.c.b16 %v312, %v311
    %v325 = vpack.c.b16 %v314, %v313
    %v326 = vpack.c.b16 %v316, %v315
    %v327 = vpack.c.b16 %v318, %v317
    %v328 = vpack.c.b16 %v320, %v319
    %337 = vmatprep.subr.bf16.mxu0 0
    %338 = vmatpush1.bf16.msra.mxu0 %v321
    %339 = vmatprep.subr.bf16.mxu0 0
    %340 = vmatpush1.bf16.msra.mxu0 %v322
    %341 = vmatprep.subr.bf16.mxu0 0
    %342 = vmatpush1.bf16.msra.mxu0 %v323
    %343 = vmatprep.subr.bf16.mxu0 0
    %344 = vmatpush1.bf16.msra.mxu0 %v324
    %345 = vmatprep.subr.bf16.mxu0 0
    %346 = vmatpush1.bf16.msra.mxu0 %v325
    %347 = vmatprep.subr.bf16.mxu0 0
    %348 = vmatpush1.bf16.msra.mxu0 %v326
    %349 = vmatprep.subr.bf16.mxu0 0
    %350 = vmatpush1.bf16.msra.mxu0 %v327
    %351 = vmatprep.subr.bf16.mxu0 0
    %352 = vmatpush1.bf16.msra.mxu0 %v328
    %353 = vmatprep.subr.bf16.mxu0 0
    %354 = vmatpush1.bf16.msra.mxu0 0
    %355 = vmatprep.subr.bf16.mxu0 0
    %356 = vmatpush1.bf16.msra.mxu0 0
    %357 = vmatprep.subr.bf16.mxu0 0
    %358 = vmatpush1.bf16.msra.mxu0 0
    %359 = vmatprep.subr.bf16.mxu0 0
    %360 = vmatpush1.bf16.msra.mxu0 0
    %361 = vmatprep.subr.bf16.mxu0 0
    %362 = vmatpush1.bf16.msra.mxu0 0
    %363 = vmatprep.subr.bf16.mxu0 0
    %364 = vmatpush1.bf16.msra.mxu0 0
    %365 = vmatprep.subr.bf16.mxu0 0
    %366 = vmatpush1.bf16.msra.mxu0 0
    %367 = vmatprep.subr.bf16.mxu0 0
    %368 = vmatpush1.bf16.msra.mxu0 0
    %369 = vmatprep.mubr.bf16.mxu0 0
    %370 = vmatmul.mubr.bf16.gmra.mrb[0].mxu0 %v264
    %v371 = vpop.f32.mrb[0].mxu0
    %v372 = vadd.f32 %v287, %v371
    %v373 = vpop.f32.mrb[0].mxu0
    %v374 = vpop.f32.mrb[0].mxu0
    %v375 = vadd.f32 %v287, %v374
    %v376 = vpop.f32.mrb[0].mxu0
    %377 = vmatprep.mubr.bf16.mxu0 0
    %378 = vmatmul.mubr.bf16.gmra.mrb[0].mxu0 %v265
    %v379 = vpop.f32.mrb[0].mxu0
    %v380 = vadd.f32 %v287, %v379
    %v381 = vpop.f32.mrb[0].mxu0
    %v382 = vpop.f32.mrb[0].mxu0
    %v383 = vadd.f32 %v287, %v382
    %v384 = vpop.f32.mrb[0].mxu0
    %385 = vdwg.mxu0
    %v386 = vadd.f32 %v372, %v375
    %v387 = vadd.f32 %v386, %v380
    %v388 = vadd.f32 %v387, %v383
    %v389 = vrot.slane %v388, 4
    %v390 = vadd.f32 %v388, %v389
    %v391 = vrot.slane %v390, 2
    %v392 = vadd.f32 %v390, %v391
    %v393 = vrot.slane %v392, 1
    %v394 = vadd.f32 %v392, %v393
    %v395 = vrcp.pop 32.0
    %v396 = vmul.f32 %v394, %v395
    %v397 = vmul.f32 %v372, %v372
    %v398 = vmul.f32 %v375, %v375
    %v399 = vmul.f32 %v380, %v380
    %v400 = vmul.f32 %v383, %v383
    %v401 = vadd.f32 %v397, %v398
    %v402 = vadd.f32 %v401, %v399
    %v403 = vadd.f32 %v402, %v400
    %v404 = vrot.slane %v403, 4
    %v405 = vadd.f32 %v403, %v404
    %v406 = vrot.slane %v405, 2
    %v407 = vadd.f32 %v405, %v406
    %v408 = vrot.slane %v407, 1
    %v409 = vadd.f32 %v407, %v408
    %v410 = vmul.f32 %v409, %v395
    %v411 = vmul.f32 %v396, %v396
    %v412 = vsub.f32 %v410, %v411
    %v413 = vmax.f32 %v412, 0.0
    %v414 = vsub.f32 %v372, %v396
    %v415 = vsub.f32 %v375, %v396
    %v416 = vsub.f32 %v380, %v396
    %v417 = vsub.f32 %v383, %v396
    %v418 = vadd.f32 %v413, 1e-05
    %v419 = vrsqrt.pop %v418
    %v420 = vmul.f32 %v414, %v419
    %v421 = vmul.f32 %v415, %v419
    %v422 = vmul.f32 %v416, %v419
    %v423 = vmul.f32 %v417, %v419
    %v424 = vld [vmem:[%s8] sm:$0x1]
    %v426 = vlaneseq
    %v427 = vshrl.u32 %v426, 7
    %v428 = vsub.s32 0, %v427
    %v429 = vrot.slane %v424, %v428
    %v431 = vmul.f32 %v420, %v429
    %v432 = vmul.f32 %v421, %v429
    %v433 = vmul.f32 %v422, %v429
    %v434 = vmul.f32 %v423, %v429
    %v435 = vld [vmem:[%s9] sm:$0x1]
    %v437 = vlaneseq
    %v438 = vshrl.u32 %v437, 7
    %v439 = vsub.s32 0, %v438
    %v440 = vrot.slane %v435, %v439
    %v442 = vadd.f32 %v431, %v440
    %v443 = vadd.f32 %v432, %v440
    %v444 = vadd.f32 %v433, %v440
    %v445 = vadd.f32 %v434, %v440
    %v446 = vmax.f32 %v442, 0.0
    %v447 = vmax.f32 %v443, 0.0
    %v448 = vmax.f32 %v444, 0.0
    %v449 = vmax.f32 %v445, 0.0
    %v450 = vpack.c.bf16 %v447, %v446
    %v451 = vpack.c.bf16 %v449, %v448
    %s452 = scalar_lea.vmem %s4, 8
    %v453 = vld [vmem:[%s452] sm:$0xf]
    %v454 = vld [vmem:[%s452 + $0x4] sm:$0xf]
    %v457 = vunpack.c.l.b16 %v453
    %v458 = vunpack.c.l.b16 %v454
    %v459 = vpack.c.b16 %v458, %v457
    %s461 = scalar_lea.vmem %s5, 1
    %v462 = vld [vmem:[%s461] sm:$0x1]
    %v464 = vlaneseq
    %v465 = vshrl.u32 %v464, 7
    %v466 = vsub.s32 0, %v465
    %v467 = vrot.slane %v462, %v466
    %469 = vmatprep.subr.bf16.mxu0 0
    %470 = vmatpush1.bf16.msra.mxu0 %v450
    %471 = vmatprep.subr.bf16.mxu0 0
    %472 = vmatpush1.bf16.msra.mxu0 %v451
    %473 = vmatprep.subr.bf16.mxu0 0
    %474 = vmatpush1.bf16.msra.mxu0 %v459
    %475 = vmatprep.subr.bf16.mxu0 0
    %476 = vmatpush1.bf16.msra.mxu0 0
    %477 = vmatprep.subr.bf16.mxu0 0
    %478 = vmatpush1.bf16.msra.mxu0 0
    %479 = vmatprep.subr.bf16.mxu0 0
    %480 = vmatpush1.bf16.msra.mxu0 0
    %481 = vmatprep.subr.bf16.mxu0 0
    %482 = vmatpush1.bf16.msra.mxu0 0
    %483 = vmatprep.subr.bf16.mxu0 0
    %484 = vmatpush1.bf16.msra.mxu0 0
    %485 = vmatprep.subr.bf16.mxu0 0
    %486 = vmatpush1.bf16.msra.mxu0 0
    %487 = vmatprep.subr.bf16.mxu0 0
    %488 = vmatpush1.bf16.msra.mxu0 0
    %489 = vmatprep.subr.bf16.mxu0 0
    %490 = vmatpush1.bf16.msra.mxu0 0
    %491 = vmatprep.subr.bf16.mxu0 0
    %492 = vmatpush1.bf16.msra.mxu0 0
    %493 = vmatprep.subr.bf16.mxu0 0
    %494 = vmatpush1.bf16.msra.mxu0 0
    %495 = vmatprep.subr.bf16.mxu0 0
    %496 = vmatpush1.bf16.msra.mxu0 0
    %497 = vmatprep.subr.bf16.mxu0 0
    %498 = vmatpush1.bf16.msra.mxu0 0
    %499 = vmatprep.subr.bf16.mxu0 0
    %500 = vmatpush1.bf16.msra.mxu0 0
    %501 = vmatprep.mubr.bf16.mxu0 0
    %502 = vmatmul.mubr.bf16.gmra.mrb[0].mxu0 %v106
    %v503 = vpop.f32.mrb[0].mxu0
    %v504 = vadd.f32 %v467, %v503
    %v505 = vpop.f32.mrb[0].mxu0
    %v506 = vpop.f32.mrb[0].mxu0
    %v507 = vadd.f32 %v467, %v506
    %v508 = vpop.f32.mrb[0].mxu0
    %509 = vmatprep.mubr.bf16.mxu0 0
    %510 = vmatmul.mubr.bf16.gmra.mrb[0].mxu0 %v109
    %v511 = vpop.f32.mrb[0].mxu0
    %v512 = vadd.f32 %v467, %v511
    %v513 = vpop.f32.mrb[0].mxu0
    %v514 = vpop.f32.mrb[0].mxu0
    %v515 = vadd.f32 %v467, %v514
    %v516 = vpop.f32.mrb[0].mxu0
    %517 = vmatprep.mubr.bf16.mxu0 0
    %518 = vmatmul.mubr.bf16.gmra.mrb[0].mxu0 %v112
    %v519 = vpop.f32.mrb[0].mxu0
    %v520 = vadd.f32 %v467, %v519
    %v521 = vpop.f32.mrb[0].mxu0
    %v522 = vpop.f32.mrb[0].mxu0
    %v523 = vadd.f32 %v467, %v522
    %v524 = vpop.f32.mrb[0].mxu0
    %525 = vmatprep.mubr.bf16.mxu0 0
    %526 = vmatmul.mubr.bf16.gmra.mrb[0].mxu0 %v115
    %v527 = vpop.f32.mrb[0].mxu0
    %v528 = vadd.f32 %v467, %v527
    %v529 = vpop.f32.mrb[0].mxu0
    %v530 = vpop.f32.mrb[0].mxu0
    %v531 = vadd.f32 %v467, %v530
    %v532 = vpop.f32.mrb[0].mxu0
    %533 = vdwg.mxu0
    %v534 = vmax.f32 %v504, 0.0
    %v535 = vmax.f32 %v507, 0.0
    %v536 = vmax.f32 %v512, 0.0
    %v537 = vmax.f32 %v515, 0.0
    %v538 = vmax.f32 %v520, 0.0
    %v539 = vmax.f32 %v523, 0.0
    %v540 = vmax.f32 %v528, 0.0
    %v541 = vmax.f32 %v531, 0.0
    %v542 = vpack.c.bf16 %v535, %v534
    %v543 = vpack.c.bf16 %v537, %v536
    %v544 = vpack.c.bf16 %v539, %v538
    %v545 = vpack.c.bf16 %v541, %v540
    %546 = vmatprep.subr.bf16.mxu0 0
    %547 = vmatpush1.bf16.msra.mxu0 %v542
    %548 = vmatprep.subr.bf16.mxu0 0
    %549 = vmatpush1.bf16.msra.mxu0 %v543
    %550 = vmatprep.subr.bf16.mxu0 0
    %551 = vmatpush1.bf16.msra.mxu0 %v544
    %552 = vmatprep.subr.bf16.mxu0 0
    %553 = vmatpush1.bf16.msra.mxu0 %v545
    %554 = vmatprep.subr.bf16.mxu0 0
    %555 = vmatpush1.bf16.msra.mxu0 0
    %556 = vmatprep.subr.bf16.mxu0 0
    %557 = vmatpush1.bf16.msra.mxu0 0
    %558 = vmatprep.subr.bf16.mxu0 0
    %559 = vmatpush1.bf16.msra.mxu0 0
    %560 = vmatprep.subr.bf16.mxu0 0
    %561 = vmatpush1.bf16.msra.mxu0 0
    %562 = vmatprep.subr.bf16.mxu0 0
    %563 = vmatpush1.bf16.msra.mxu0 0
    %564 = vmatprep.subr.bf16.mxu0 0
    %565 = vmatpush1.bf16.msra.mxu0 0
    %566 = vmatprep.subr.bf16.mxu0 0
    %567 = vmatpush1.bf16.msra.mxu0 0
    %568 = vmatprep.subr.bf16.mxu0 0
    %569 = vmatpush1.bf16.msra.mxu0 0
    %570 = vmatprep.subr.bf16.mxu0 0
    %571 = vmatpush1.bf16.msra.mxu0 0
    %572 = vmatprep.subr.bf16.mxu0 0
    %573 = vmatpush1.bf16.msra.mxu0 0
    %574 = vmatprep.subr.bf16.mxu0 0
    %575 = vmatpush1.bf16.msra.mxu0 0
    %576 = vmatprep.subr.bf16.mxu0 0
    %577 = vmatpush1.bf16.msra.mxu0 0
    %578 = vmatprep.mubr.bf16.mxu0 0
    %579 = vmatmul.mubr.bf16.gmra.mrb[0].mxu0 %v206
    %v580 = vpop.f32.mrb[0].mxu0
    %v581 = vadd.f32 0.0, %v580
    %v582 = vpop.f32.mrb[0].mxu0
    %v583 = vpop.f32.mrb[0].mxu0
    %v584 = vadd.f32 0.0, %v583
    %v585 = vpop.f32.mrb[0].mxu0
    %586 = vmatprep.mubr.bf16.mxu0 0
    %587 = vmatmul.mubr.bf16.gmra.mrb[0].mxu0 %v209
    %v588 = vpop.f32.mrb[0].mxu0
    %v589 = vadd.f32 0.0, %v588
    %v590 = vpop.f32.mrb[0].mxu0
    %v591 = vpop.f32.mrb[0].mxu0
    %v592 = vadd.f32 0.0, %v591
    %v593 = vpop.f32.mrb[0].mxu0
    %594 = vdwg.mxu0
    %v595 = vadd.f32 %v446, %v581
    %v596 = vadd.f32 %v447, %v584
    %v597 = vadd.f32 %v448, %v589
    %v598 = vadd.f32 %v449, %v592
    %v599 = vpack.c.bf16 %v596, %v595
    %v600 = vpack.c.bf16 %v598, %v597
    %s601 = scalar_lea.vmem [#allocation2], 64
    %v602 = vld [vmem:[%s601] sm:$0xf]
    %v603 = vld [vmem:[%s601 + $0x4] sm:$0xf]
    %v604 = vld [vmem:[%s601 + $0x8] sm:$0xf]
    %v605 = vld [vmem:[%s601 + $0xc] sm:$0xf]
    %v606 = vld [vmem:[%s601 + $0x10] sm:$0xf]
    %v607 = vld [vmem:[%s601 + $0x14] sm:$0xf]
    %v608 = vld [vmem:[%s601 + $0x18] sm:$0xf]
    %v609 = vld [vmem:[%s601 + $0x1c] sm:$0xf]
    %v610 = vld [vmem:[%s601 + $0x20] sm:$0xf]
    %v611 = vld [vmem:[%s601 + $0x24] sm:$0xf]
    %v612 = vld [vmem:[%s601 + $0x28] sm:$0xf]
    %v613 = vld [vmem:[%s601 + $0x2c] sm:$0xf]
    %v614 = vld [vmem:[%s601 + $0x30] sm:$0xf]
    %v615 = vld [vmem:[%s601 + $0x34] sm:$0xf]
    %v616 = vld [vmem:[%s601 + $0x38] sm:$0xf]
    %v617 = vld [vmem:[%s601 + $0x3c] sm:$0xf]
    %s618 = scalar_lea.vmem %s7, 1
    %v619 = vld [vmem:[%s618] sm:$0x1]
    %v621 = vlaneseq
    %v622 = vshrl.u32 %v621, 7
    %v623 = vsub.s32 0, %v622
    %v624 = vrot.slane %v619, %v623
    %v642 = vunpack.c.l.b16 %v602
    %v643 = vunpack.c.l.b16 %v603
    %v644 = vunpack.c.l.b16 %v604
    %v645 = vunpack.c.l.b16 %v605
    %v646 = vunpack.c.l.b16 %v606
    %v647 = vunpack.c.l.b16 %v607
    %v648 = vunpack.c.l.b16 %v608
    %v649 = vunpack.c.l.b16 %v609
    %v650 = vunpack.c.l.b16 %v610
    %v651 = vunpack.c.l.b16 %v611
    %v652 = vunpack.c.l.b16 %v612
    %v653 = vunpack.c.l.b16 %v613
    %v654 = vunpack.c.l.b16 %v614
    %v655 = vunpack.c.l.b16 %v615
    %v656 = vunpack.c.l.b16 %v616
    %v657 = vunpack.c.l.b16 %v617
    %v658 = vpack.c.b16 %v643, %v642
    %v659 = vpack.c.b16 %v645, %v644
    %v660 = vpack.c.b16 %v647, %v646
    %v661 = vpack.c.b16 %v649, %v648
    %v662 = vpack.c.b16 %v651, %v650
    %v663 = vpack.c.b16 %v653, %v652
    %v664 = vpack.c.b16 %v655, %v654
    %v665 = vpack.c.b16 %v657, %v656
    %674 = vmatprep.subr.bf16.mxu0 0
    %675 = vmatpush1.bf16.msra.mxu0 %v658
    %676 = vmatprep.subr.bf16.mxu0 0
    %677 = vmatpush1.bf16.msra.mxu0 %v659
    %678 = vmatprep.subr.bf16.mxu0 0
    %679 = vmatpush1.bf16.msra.mxu0 %v660
    %680 = vmatprep.subr.bf16.mxu0 0
    %681 = vmatpush1.bf16.msra.mxu0 %v661
    %682 = vmatprep.subr.bf16.mxu0 0
    %683 = vmatpush1.bf16.msra.mxu0 %v662
    %684 = vmatprep.subr.bf16.mxu0 0
    %685 = vmatpush1.bf16.msra.mxu0 %v663
    %686 = vmatprep.subr.bf16.mxu0 0
    %687 = vmatpush1.bf16.msra.mxu0 %v664
    %688 = vmatprep.subr.bf16.mxu0 0
    %689 = vmatpush1.bf16.msra.mxu0 %v665
    %690 = vmatprep.subr.bf16.mxu0 0
    %691 = vmatpush1.bf16.msra.mxu0 0
    %692 = vmatprep.subr.bf16.mxu0 0
    %693 = vmatpush1.bf16.msra.mxu0 0
    %694 = vmatprep.subr.bf16.mxu0 0
    %695 = vmatpush1.bf16.msra.mxu0 0
    %696 = vmatprep.subr.bf16.mxu0 0
    %697 = vmatpush1.bf16.msra.mxu0 0
    %698 = vmatprep.subr.bf16.mxu0 0
    %699 = vmatpush1.bf16.msra.mxu0 0
    %700 = vmatprep.subr.bf16.mxu0 0
    %701 = vmatpush1.bf16.msra.mxu0 0
    %702 = vmatprep.subr.bf16.mxu0 0
    %703 = vmatpush1.bf16.msra.mxu0 0
    %704 = vmatprep.subr.bf16.mxu0 0
    %705 = vmatpush1.bf16.msra.mxu0 0
    %706 = vmatprep.mubr.bf16.mxu0 0
    %707 = vmatmul.mubr.bf16.gmra.mrb[0].mxu0 %v599
    %v708 = vpop.f32.mrb[0].mxu0
    %v709 = vadd.f32 %v624, %v708
    %v710 = vpop.f32.mrb[0].mxu0
    %v711 = vpop.f32.mrb[0].mxu0
    %v712 = vadd.f32 %v624, %v711
    %v713 = vpop.f32.mrb[0].mxu0
    %714 = vmatprep.mubr.bf16.mxu0 0
    %715 = vmatmul.mubr.bf16.gmra.mrb[0].mxu0 %v600
    %v716 = vpop.f32.mrb[0].mxu0
    %v717 = vadd.f32 %v624, %v716
    %v718 = vpop.f32.mrb[0].mxu0
    %v719 = vpop.f32.mrb[0].mxu0
    %v720 = vadd.f32 %v624, %v719
    %v721 = vpop.f32.mrb[0].mxu0
    %722 = vdwg.mxu0
    %v723 = vadd.f32 %v709, %v712
    %v724 = vadd.f32 %v723, %v717
    %v725 = vadd.f32 %v724, %v720
    %v726 = vrot.slane %v725, 4
    %v727 = vadd.f32 %v725, %v726
    %v728 = vrot.slane %v727, 2
    %v729 = vadd.f32 %v727, %v728
    %v730 = vrot.slane %v729, 1
    %v731 = vadd.f32 %v729, %v730
    %v732 = vmul.f32 %v731, %v395
    %v733 = vmul.f32 %v709, %v709
    %v734 = vmul.f32 %v712, %v712
    %v735 = vmul.f32 %v717, %v717
    %v736 = vmul.f32 %v720, %v720
    %v737 = vadd.f32 %v733, %v734
    %v738 = vadd.f32 %v737, %v735
    %v739 = vadd.f32 %v738, %v736
    %v740 = vrot.slane %v739, 4
    %v741 = vadd.f32 %v739, %v740
    %v742 = vrot.slane %v741, 2
    %v743 = vadd.f32 %v741, %v742
    %v744 = vrot.slane %v743, 1
    %v745 = vadd.f32 %v743, %v744
    %v746 = vmul.f32 %v745, %v395
    %v747 = vmul.f32 %v732, %v732
    %v748 = vsub.f32 %v746, %v747
    %v749 = vmax.f32 %v748, 0.0
    %v750 = vsub.f32 %v709, %v732
    %v751 = vsub.f32 %v712, %v732
    %v752 = vsub.f32 %v717, %v732
    %v753 = vsub.f32 %v720, %v732
    %v754 = vadd.f32 %v749, 1e-05
    %v755 = vrsqrt.pop %v754
    %v756 = vmul.f32 %v750, %v755
    %v757 = vmul.f32 %v751, %v755
    %v758 = vmul.f32 %v752, %v755
    %v759 = vmul.f32 %v753, %v755
    %s760 = scalar_lea.vmem %s8, 1
    %v761 = vld [vmem:[%s760] sm:$0x1]
    %v763 = vlaneseq
    %v764 = vshrl.u32 %v763, 7
    %v765 = vsub.s32 0, %v764
    %v766 = vrot.slane %v761, %v765
    %v768 = vmul.f32 %v756, %v766
    %v769 = vmul.f32 %v757, %v766
    %v770 = vmul.f32 %v758, %v766
    %v771 = vmul.f32 %v759, %v766
    %s772 = scalar_lea.vmem %s9, 1
    %v773 = vld [vmem:[%s772] sm:$0x1]
    %v775 = vlaneseq
    %v776 = vshrl.u32 %v775, 7
    %v777 = vsub.s32 0, %v776
    %v778 = vrot.slane %v773, %v777
    %v780 = vadd.f32 %v768, %v778
    %v781 = vadd.f32 %v769, %v778
    %v782 = vadd.f32 %v770, %v778
    %v783 = vadd.f32 %v771, %v778
    %v784 = vmax.f32 %v780, 0.0
    %v785 = vmax.f32 %v781, 0.0
    %v786 = vmax.f32 %v782, 0.0
    %v787 = vmax.f32 %v783, 0.0
    %v788 = vld [vmem:[%s3] sm:$0x1]
    %v789 = vpack.c.bf16 %v785, %v784
    %v790 = vpack.c.bf16 %v787, %v786
    %vm791 = vcmask 261120
    %v793 = vsel %vm791, %v788, 0
    %795 = vmatprep.subr.bf16.mxu0 0
    %796 = vmatpush1.bf16.msra.mxu0 %v789
    %797 = vmatprep.subr.bf16.mxu0 0
    %798 = vmatpush1.bf16.msra.mxu0 %v790
    %799 = vmatprep.subr.bf16.mxu0 0
    %800 = vmatpush1.bf16.msra.mxu0 0
    %801 = vmatprep.subr.bf16.mxu0 0
    %802 = vmatpush1.bf16.msra.mxu0 0
    %803 = vmatprep.subr.bf16.mxu0 0
    %804 = vmatpush1.bf16.msra.mxu0 0
    %805 = vmatprep.subr.bf16.mxu0 0
    %806 = vmatpush1.bf16.msra.mxu0 0
    %807 = vmatprep.subr.bf16.mxu0 0
    %808 = vmatpush1.bf16.msra.mxu0 0
    %809 = vmatprep.subr.bf16.mxu0 0
    %810 = vmatpush1.bf16.msra.mxu0 0
    %811 = vmatprep.subr.bf16.mxu0 0
    %812 = vmatpush1.bf16.msra.mxu0 0
    %813 = vmatprep.subr.bf16.mxu0 0
    %814 = vmatpush1.bf16.msra.mxu0 0
    %815 = vmatprep.subr.bf16.mxu0 0
    %816 = vmatpush1.bf16.msra.mxu0 0
    %817 = vmatprep.subr.bf16.mxu0 0
    %818 = vmatpush1.bf16.msra.mxu0 0
    %819 = vmatprep.subr.bf16.mxu0 0
    %820 = vmatpush1.bf16.msra.mxu0 0
    %821 = vmatprep.subr.bf16.mxu0 0
    %822 = vmatpush1.bf16.msra.mxu0 0
    %823 = vmatprep.subr.bf16.mxu0 0
    %824 = vmatpush1.bf16.msra.mxu0 0
    %825 = vmatprep.subr.bf16.mxu0 0
    %826 = vmatpush1.bf16.msra.mxu0 0
    %827 = vmatprep.mubr.bf16.mxu0 0
    %828 = vmatmul.mubr.bf16.gmra.mrb[0].mxu0 %v793
    %v829 = vpop.f32.mrb[0].mxu0
    %v830 = vadd.f32 0.0, %v829
    %v831 = vpop.f32.mrb[0].mxu0
    %v832 = vpop.f32.mrb[0].mxu0
    %v833 = vpop.f32.mrb[0].mxu0
    %834 = vdwg.mxu0
    %835 = vst [vmem:[#allocation5] sm:$0x3] %v830
    // Predicated region
    $region46: #{tpu_custom_call.1} parent=1 // pred_check
      _
    $region47: #{tpu_custom_call.1} parent=1 // pred_check_branch
      %837 = sbr.rel (0) target = $region49
    $region48: #{tpu_custom_call.1} parent=1 // pred_region
      %s839 = ssub.s32 32, 32
      %840 = vsyncadd [#allocation4], %s839
      %s842 = sshll.u32 [#allocation5], 4
      %s843 = int_to_ptr.vmem [resolvable:$true] %s842
      %845 = dma.vmem_to_hbm [thread:$0]  %s843, 32, %s10, [#allocation4]
    $region49: #{tpu_custom_call.1} parent=1 // pred_fallthru
      _
    // Predicated region
    $region50: #{tpu_custom_call.1} parent=1 // pred_check
      _
    $region51: #{tpu_custom_call.1} parent=1 // pred_check_branch
      %847 = sbr.rel (0) target = $region53
    $region52: #{tpu_custom_call.1} parent=1 // pred_region
      %848 = dma.done [#allocation4], 32
    $region53: #{tpu_custom_call.1} parent=1 // pred_fallthru
      _
    %849 = vsyncpa [#allocation3], 1
    %850 = vsyncpa [#allocation4], 1

</llo_original>
